<compile_context>
chip_gen: v7x
topology: tpu7x:2x2x1
jax: 0.10.0
libtpu: 0.0.40
codegen_flags: <defaults>
</compile_context>

<pallas_src>
import functools
import math

import jax
import jax.numpy as jnp
from jax.experimental import pallas as pl
from jax.experimental.pallas import tpu as pltpu

# Scoped-VMEM budget (defaults are 16/32/32 MiB on v5e/v6e/v7x; physical 128/128/64 MiB).
_VMEM_LIMIT_BYTES = 64 * 1024 * 1024


def _row_tiling(R, max_tile=512):
    """Pick a row tile and (possibly padded) row count; never one giant block."""
    rp = 8 * ((R + 7) // 8)
    for t in (512, 256, 128, 64, 32, 16, 8):
        if t <= max_tile and rp % t == 0:
            return t, rp
    return 8, rp


def _seq_tile(S, max_tile=256):
    for t in (256, 128, 64, 32, 16, 8):
        if t <= max_tile and S % t == 0:
            return t
    return S  # rare fallback: S not a multiple of 8 -> full-extent block


def _layernorm(x, g, b, eps=1e-5):
    mean = jnp.mean(x, axis=-1, keepdims=True)
    c = x - mean
    var = jnp.mean(c * c, axis=-1, keepdims=True)
    return c * jax.lax.rsqrt(var + eps) * g + b


def _erf_approx(x):
    # Abramowitz & Stegun 7.1.26 (max abs err ~1.5e-7); exp/mul/add only -> Mosaic-safe.
    a1, a2, a3, a4, a5 = 0.254829592, -0.284496736, 1.421413741, -1.453152027, 1.061405429
    p = 0.3275911
    sign = jnp.where(x >= 0.0, 1.0, -1.0)
    ax = jnp.abs(x)
    t = 1.0 / (1.0 + p * ax)
    poly = ((((a5 * t + a4) * t + a3) * t + a2) * t + a1) * t
    return sign * (1.0 - poly * jnp.exp(-ax * ax))


def _gelu_erf(x):
    # PyTorch nn.GELU() default (erf-based).
    return 0.5 * x * (1.0 + _erf_approx(x * (1.0 / math.sqrt(2.0))))


# ----------------------------------------------------------------------------
# Kernel 1: fused QKV projection  y = x @ Wqkv^T + b  -> separate q, k, v outputs
# ----------------------------------------------------------------------------
def qkv_kernel(x_ref, w_ref, b_ref, q_ref, k_ref, v_ref):
    y = jax.lax.dot_general(
        x_ref[...].astype(jnp.bfloat16), w_ref[...],
        dimension_numbers=(((1,), (1,)), ((), ())),
        preferred_element_type=jnp.float32,
    ) + b_ref[...]
    d = q_ref.shape[-1]
    q_ref[...] = y[:, :d].astype(q_ref.dtype)
    k_ref[...] = y[:, d:2 * d].astype(k_ref.dtype)
    v_ref[...] = y[:, 2 * d:].astype(v_ref.dtype)


def qkv_proj(x2d, w_qkv_bf16, b_qkv):
    R, D = x2d.shape
    tr, rp = _row_tiling(R)
    xin = x2d if rp == R else jnp.pad(x2d, ((0, rp - R), (0, 0)))
    q, k, v = pl.pallas_call(
        qkv_kernel,
        out_shape=(jax.ShapeDtypeStruct((rp, D), x2d.dtype),
                   jax.ShapeDtypeStruct((rp, D), x2d.dtype),
                   jax.ShapeDtypeStruct((rp, D), x2d.dtype)),
        grid_spec=pltpu.PrefetchScalarGridSpec(
            num_scalar_prefetch=0,
            grid=(rp // tr,),
            in_specs=[
                pl.BlockSpec((tr, D), lambda i: (i, 0)),
                pl.BlockSpec((3 * D, D), lambda i: (0, 0)),
                pl.BlockSpec((1, 3 * D), lambda i: (0, 0)),
            ],
            out_specs=[
                pl.BlockSpec((tr, D), lambda i: (i, 0)),
                pl.BlockSpec((tr, D), lambda i: (i, 0)),
                pl.BlockSpec((tr, D), lambda i: (i, 0)),
            ],
        ),
        compiler_params=pltpu.CompilerParams(
            dimension_semantics=("parallel",),
            vmem_limit_bytes=_VMEM_LIMIT_BYTES),
    )(xin, w_qkv_bf16, b_qkv.reshape(1, 3 * D))
    if rp != R:
        q, k, v = q[:R], k[:R], v[:R]
    return q, k, v


# ----------------------------------------------------------------------------
# Kernel 2: scaled dot-product attention, grid = (batch, q-tile); heads in-kernel
# ----------------------------------------------------------------------------
def attention_kernel(q_ref, k_ref, v_ref, m_ref, o_ref, w_ref, *, n_heads, dk, scale):
    mask = m_ref[0] != 0                       # (tq, S) from int8
    neg = jnp.float32(-1e9)
    outs = []
    for h in range(n_heads):                   # static unroll; no dynamic lane slicing
        lo, hi = h * dk, (h + 1) * dk
        q = q_ref[0, :, lo:hi].astype(jnp.bfloat16)   # (tq, dk)
        k = k_ref[0, :, lo:hi].astype(jnp.bfloat16)   # (S,  dk)
        v = v_ref[0, :, lo:hi].astype(jnp.bfloat16)   # (S,  dk)
        s = jax.lax.dot_general(                       # q @ k^T (NT, no transpose)
            q, k, dimension_numbers=(((1,), (1,)), ((), ())),
            preferred_element_type=jnp.float32,
        ) * scale
        s = jnp.where(mask, neg, s)                    # masked_fill_(attn_mask, -1e9)
        m = jnp.max(s, axis=-1, keepdims=True)
        p = jnp.exp(s - m)
        denom = jnp.sum(p, axis=-1, keepdims=True)
        w = p * pl.reciprocal(denom, approx=True)      # softmax(dim=-1), divide on EUP
        # TODO(synk): attention dropout (eval mode -> identity)
        w_ref[0, h] = w.astype(w_ref.dtype)
        o = jnp.dot(w.astype(jnp.bfloat16), v, preferred_element_type=jnp.float32)
        outs.append(o.astype(o_ref.dtype))
    o_ref[0] = jnp.concatenate(outs, axis=-1)          # lane-dense (tq, D) store


def attention(q3, k3, v3, mask_i8, *, n_heads):
    B, S, D = q3.shape
    H = n_heads
    dk = D // H
    tq = _seq_tile(S)
    scale = 1.0 / math.sqrt(dk)
    kern = functools.partial(attention_kernel, n_heads=H, dk=dk, scale=scale)
    return pl.pallas_call(
        kern,
        out_shape=(
            jax.ShapeDtypeStruct((B, S, D), q3.dtype),
            jax.ShapeDtypeStruct((B, H, S, S), jnp.float32),
        ),
        grid_spec=pltpu.PrefetchScalarGridSpec(
            num_scalar_prefetch=0,
            grid=(B, S // tq),
            in_specs=[
                pl.BlockSpec((1, tq, D), lambda b, qi: (b, qi, 0)),   # q tile
                pl.BlockSpec((1, S, D), lambda b, qi: (b, 0, 0)),     # K resident per b
                pl.BlockSpec((1, S, D), lambda b, qi: (b, 0, 0)),     # V resident per b
                pl.BlockSpec((1, tq, S), lambda b, qi: (b, qi, 0)),   # int8 mask tile
            ],
            out_specs=[
                pl.BlockSpec((1, tq, D), lambda b, qi: (b, qi, 0)),
                pl.BlockSpec((1, H, tq, S), lambda b, qi: (b, 0, qi, 0)),
            ],
        ),
        compiler_params=pltpu.CompilerParams(
            dimension_semantics=("parallel", "parallel"),
            vmem_limit_bytes=_VMEM_LIMIT_BYTES),
    )(q3, k3, v3, mask_i8)


# ----------------------------------------------------------------------------
# Kernel 3: out-proj + residual + LN1 + FFN(GELU) + residual + LN2 (fully fused)
# ----------------------------------------------------------------------------
def post_attn_ffn_kernel(a_ref, x_ref, wo_ref, bo_ref, g1_ref, b1_ref,
                         w1_ref, bf1_ref, w2_ref, bf2_ref, g2_ref, b2_ref, o_ref):
    proj = jax.lax.dot_general(
        a_ref[...].astype(jnp.bfloat16), wo_ref[...],
        dimension_numbers=(((1,), (1,)), ((), ())),
        preferred_element_type=jnp.float32,
    ) + bo_ref[...]
    # TODO(synk): resid dropout1 (eval mode -> identity)
    h1 = _layernorm(x_ref[...] + proj, g1_ref[...], b1_ref[...])

    z = jax.lax.dot_general(
        h1.astype(jnp.bfloat16), w1_ref[...],
        dimension_numbers=(((1,), (1,)), ((), ())),
        preferred_element_type=jnp.float32,
    ) + bf1_ref[...]
    z = _gelu_erf(z)
    f = jax.lax.dot_general(
        z.astype(jnp.bfloat16), w2_ref[...],
        dimension_numbers=(((1,), (1,)), ((), ())),
        preferred_element_type=jnp.float32,
    ) + bf2_ref[...]
    # TODO(synk): resid dropout2 (eval mode -> identity)
    y = h1 + f
    o_ref[...] = _layernorm(y, g2_ref[...], b2_ref[...]).astype(o_ref.dtype)


def post_attn_ffn(attn2d, x2d, wo, bo, g1, b1, w1, bf1, w2, bf2, g2, b2):
    R, D = x2d.shape
    F = w1.shape[0]
    tr, rp = _row_tiling(R, max_tile=256)   # smaller row tile: weights are resident
    if rp != R:
        attn2d = jnp.pad(attn2d, ((0, rp - R), (0, 0)))
        x2d = jnp.pad(x2d, ((0, rp - R), (0, 0)))
    out = pl.pallas_call(
        post_attn_ffn_kernel,
        out_shape=jax.ShapeDtypeStruct((rp, D), jnp.float32),
        grid_spec=pltpu.PrefetchScalarGridSpec(
            num_scalar_prefetch=0,
            grid=(rp // tr,),
            in_specs=[
                pl.BlockSpec((tr, D), lambda i: (i, 0)),    # attn output
                pl.BlockSpec((tr, D), lambda i: (i, 0)),    # residual input x
                pl.BlockSpec((D, D), lambda i: (0, 0)),     # wo (bf16)
                pl.BlockSpec((1, D), lambda i: (0, 0)),     # bo
                pl.BlockSpec((1, D), lambda i: (0, 0)),     # ln1 gamma
                pl.BlockSpec((1, D), lambda i: (0, 0)),     # ln1 beta
                pl.BlockSpec((F, D), lambda i: (0, 0)),     # ffn w1 (bf16)
                pl.BlockSpec((1, F), lambda i: (0, 0)),     # ffn b1
                pl.BlockSpec((D, F), lambda i: (0, 0)),     # ffn w2 (bf16)
                pl.BlockSpec((1, D), lambda i: (0, 0)),     # ffn b2
                pl.BlockSpec((1, D), lambda i: (0, 0)),     # ln2 gamma
                pl.BlockSpec((1, D), lambda i: (0, 0)),     # ln2 beta
            ],
            out_specs=pl.BlockSpec((tr, D), lambda i: (i, 0)),
        ),
        compiler_params=pltpu.CompilerParams(
            dimension_semantics=("parallel",),
            vmem_limit_bytes=_VMEM_LIMIT_BYTES),
    )(attn2d, x2d, wo, bo.reshape(1, D), g1.reshape(1, D), b1.reshape(1, D),
      w1, bf1.reshape(1, F), w2, bf2.reshape(1, D), g2.reshape(1, D), b2.reshape(1, D))
    return out[:R] if rp != R else out


# ----------------------------------------------------------------------------
# DecoderLayer.forward equivalent
# ----------------------------------------------------------------------------
def decoder_layer_forward(inputs, attn_mask, params, *, n_heads):
    B, S, D = inputs.shape
    x2d = inputs.reshape(B * S, D)

    # Weights pre-cast to bf16 once (halves weight HBM/VMEM, feeds MXU at full rate).
    w_qkv = params["w_qkv"].astype(jnp.bfloat16)
    wo = params["wo"].astype(jnp.bfloat16)
    w1 = params["ffn_w1"].astype(jnp.bfloat16)
    w2 = params["ffn_w2"].astype(jnp.bfloat16)

    # --- fused QKV projection (Pallas) ---
    q2d, k2d, v2d = qkv_proj(x2d, w_qkv, params["b_qkv"])
    q3, k3, v3 = (t.reshape(B, S, D) for t in (q2d, k2d, v2d))   # free reshapes

    # --- scaled dot-product attention (Pallas; heads handled in-kernel) ---
    mask_i8 = attn_mask.astype(jnp.int8)
    attn3, attn_w = attention(q3, k3, v3, mask_i8, n_heads=n_heads)
    attn2d = attn3.reshape(B * S, D)

    # --- out-proj + dropout1(id) + LN1 + FFN + dropout2(id) + LN2 (Pallas, fused) ---
    out2d = post_attn_ffn(attn2d, x2d, wo, params["bo"],
                          params["ln1_g"], params["ln1_b"],
                          w1, params["ffn_b1"], w2, params["ffn_b2"],
                          params["ln2_g"], params["ln2_b"])

    return out2d.reshape(B, S, D), attn_w


# ----------------------------------------------------------------------------
# Pure-JAX reference (erf GELU, f32 everywhere) for correctness check
# ----------------------------------------------------------------------------
def reference_forward(inputs, attn_mask, params, *, n_heads):
    B, S, D = inputs.shape
    H = n_heads
    dk = D // H

    def lin(x, w, b):
        return x @ w.T + b

    def ln(x, g, b):
        mean = jnp.mean(x, axis=-1, keepdims=True)
        c = x - mean
        var = jnp.mean(c * c, axis=-1, keepdims=True)
        return c / jnp.sqrt(var + 1e-5) * g + b

    qkv = lin(inputs, params["w_qkv"], params["b_qkv"])
    qp, kp, vp = qkv[..., :D], qkv[..., D:2 * D], qkv[..., 2 * D:]
    to_heads = lambda t: t.reshape(B, S, H, dk).transpose(0, 2, 1, 3)
    q, k, v = to_heads(qp), to_heads(kp), to_heads(vp)
    scores = (q @ k.transpose(0, 1, 3, 2)) / math.sqrt(dk)
    scores = jnp.where(attn_mask[:, None, :, :], -1e9, scores)
    w = jax.nn.softmax(scores, axis=-1)
    attn = (w @ v).transpose(0, 2, 1, 3).reshape(B, S, D)
    a = lin(attn, params["wo"], params["bo"])
    h1 = ln(inputs + a, params["ln1_g"], params["ln1_b"])
    z = jax.nn.gelu(lin(h1, params["ffn_w1"], params["ffn_b1"]), approximate=False)
    f = lin(z, params["ffn_w2"], params["ffn_b2"])
    out = ln(h1 + f, params["ln2_g"], params["ln2_b"])
    return out, w


if __name__ == "__main__":
    B, S = 2, 8
    d_model = 32
    n_heads = 4
    d_ff = 128

    key = jax.random.PRNGKey(0)
    ks = jax.random.split(key, 12)

    params = {
        # WQ/WK/WV stacked ([3*D, D], PyTorch [out, in] layout) and their biases
        "w_qkv": 0.02 * jax.random.normal(ks[0], (3 * d_model, d_model), jnp.float32),
        "b_qkv": 0.02 * jax.random.normal(ks[1], (3 * d_model,), jnp.float32),
        # mha.linear
        "wo": 0.02 * jax.random.normal(ks[2], (d_model, d_model), jnp.float32),
        "bo": 0.02 * jax.random.normal(ks[3], (d_model,), jnp.float32),
        # layernorm1 / layernorm2
        "ln1_g": 1.0 + 0.1 * jax.random.normal(ks[4], (d_model,), jnp.float32),
        "ln1_b": 0.1 * jax.random.normal(ks[5], (d_model,), jnp.float32),
        "ln2_g": 1.0 + 0.1 * jax.random.normal(ks[6], (d_model,), jnp.float32),
        "ln2_b": 0.1 * jax.random.normal(ks[7], (d_model,), jnp.float32),
        # ffn.linear1 / ffn.linear2 (nn.init.normal_(std=0.02))
        "ffn_w1": 0.02 * jax.random.normal(ks[8], (d_ff, d_model), jnp.float32),
        "ffn_b1": 0.02 * jax.random.normal(ks[9], (d_ff,), jnp.float32),
        "ffn_w2": 0.02 * jax.random.normal(ks[10], (d_model, d_ff), jnp.float32),
        "ffn_b2": 0.02 * jax.random.normal(ks[11], (d_model,), jnp.float32),
    }

    inputs = jax.random.normal(jax.random.PRNGKey(42), (B, S, d_model), jnp.float32)
    # Causal decoder mask: True above the diagonal (masked), as used with masked_fill_.
    attn_mask = jnp.broadcast_to(
        jnp.triu(jnp.ones((S, S), jnp.bool_), k=1), (B, S, S))

    out, attn_w = decoder_layer_forward(inputs, attn_mask, params, n_heads=n_heads)
    jax.block_until_ready(out)
    jax.block_until_ready(attn_w)

    out_ref, attn_w_ref = reference_forward(inputs, attn_mask, params, n_heads=n_heads)

    assert out.shape == (B, S, d_model)
    assert attn_w.shape == (B, n_heads, S, S)
    # bf16 MXU operands + approx reciprocal/erf: f32-accumulated, well within 1e-2.
    assert jnp.allclose(out, out_ref, atol=1e-2, rtol=1e-2)
    assert jnp.allclose(attn_w, attn_w_ref, atol=1e-2, rtol=1e-2)

    print("KERNEL_OK")
</pallas_src>

<mosaic_0001>
module attributes {stable_mosaic.version = 11 : i64} {
  func.func @qkv_kernel(%arg0: i32, %arg1: memref<16x32xf32, #tpu.memory_space<vmem>>, %arg2: memref<96x32xbf16, #tpu.memory_space<vmem>>, %arg3: memref<1x96xf32, #tpu.memory_space<vmem>>, %arg4: memref<16x32xf32, #tpu.memory_space<vmem>>, %arg5: memref<16x32xf32, #tpu.memory_space<vmem>>, %arg6: memref<16x32xf32, #tpu.memory_space<vmem>>) attributes {dimension_semantics = [#tpu.dimension_semantics<parallel>], iteration_bounds = array<i64: 1>, scalar_prefetch = 0 : i64, scratch_operands = 0 : i64, tpu.core_type = #tpu.core_type<tc>, window_params = [{transform_indices = @transform_0, window_bounds = array<i64: 16, 32>}, {pipeline_mode = #tpu.pipeline_mode<synchronous>, transform_indices = @transform_1, window_bounds = array<i64: 96, 32>}, {pipeline_mode = #tpu.pipeline_mode<synchronous>, transform_indices = @transform_2, window_bounds = array<i64: 1, 96>}, {transform_indices = @transform_3, window_bounds = array<i64: 16, 32>}, {transform_indices = @transform_4, window_bounds = array<i64: 16, 32>}, {transform_indices = @transform_5, window_bounds = array<i64: 16, 32>}]} {
    %c0 = arith.constant 0 : index
    %c0_0 = arith.constant 0 : index
    %0 = vector.load %arg1[%c0, %c0_0] : memref<16x32xf32, #tpu.memory_space<vmem>>, vector<16x32xf32>
    %1 = arith.truncf %0 : vector<16x32xf32> to vector<16x32xbf16>
    %c0_1 = arith.constant 0 : index
    %c0_2 = arith.constant 0 : index
    %2 = vector.load %arg2[%c0_1, %c0_2] : memref<96x32xbf16, #tpu.memory_space<vmem>>, vector<96x32xbf16>
    %cst = arith.constant dense<0.000000e+00> : vector<16x96xf32>
    %3 = tpu.matmul %1, %2, %cst {dimension_numbers = #tpu.dot_dimension_numbers<[1], [1], [0], [0], [0, 0, 1, 0], [], []>} : vector<16x32xbf16>, vector<96x32xbf16>, vector<16x96xf32> -> vector<16x96xf32>
    %c0_3 = arith.constant 0 : index
    %c0_4 = arith.constant 0 : index
    %4 = vector.load %arg3[%c0_3, %c0_4] : memref<1x96xf32, #tpu.memory_space<vmem>>, vector<1x96xf32>
    %5 = vector.broadcast %4 : vector<1x96xf32> to vector<16x96xf32>
    %6 = arith.addf %3, %5 : vector<16x96xf32>
    %7 = vector.extract_strided_slice %6 {offsets = [0, 0], sizes = [16, 32], strides = [1, 1]} : vector<16x96xf32> to vector<16x32xf32>
    %c0_5 = arith.constant 0 : index
    %c0_6 = arith.constant 0 : index
    %8 = vector.load %arg4[%c0_5, %c0_6] : memref<16x32xf32, #tpu.memory_space<vmem>>, vector<16x32xf32>
    tpu.vector_store %arg4[%c0_5, %c0_6], %7 {strides = array<i32>} : memref<16x32xf32, #tpu.memory_space<vmem>>, vector<16x32xf32>,
    %9 = vector.extract_strided_slice %6 {offsets = [0, 32], sizes = [16, 32], strides = [1, 1]} : vector<16x96xf32> to vector<16x32xf32>
    %c0_7 = arith.constant 0 : index
    %c0_8 = arith.constant 0 : index
    %10 = vector.load %arg5[%c0_7, %c0_8] : memref<16x32xf32, #tpu.memory_space<vmem>>, vector<16x32xf32>
    tpu.vector_store %arg5[%c0_7, %c0_8], %9 {strides = array<i32>} : memref<16x32xf32, #tpu.memory_space<vmem>>, vector<16x32xf32>,
    %11 = vector.extract_strided_slice %6 {offsets = [0, 64], sizes = [16, 32], strides = [1, 1]} : vector<16x96xf32> to vector<16x32xf32>
    %c0_9 = arith.constant 0 : index
    %c0_10 = arith.constant 0 : index
    %12 = vector.load %arg6[%c0_9, %c0_10] : memref<16x32xf32, #tpu.memory_space<vmem>>, vector<16x32xf32>
    tpu.vector_store %arg6[%c0_9, %c0_10], %11 {strides = array<i32>} : memref<16x32xf32, #tpu.memory_space<vmem>>, vector<16x32xf32>,
    return
  }
  func.func @transform_0(%arg0: i32) -> (i32, i32) {
    %c0_i32 = arith.constant 0 : i32
    %c0_i32_0 = arith.constant 0 : i32
    return %arg0, %c0_i32 : i32, i32
  }
  func.func @transform_1(%arg0: i32) -> (i32, i32) {
    %c0_i32 = arith.constant 0 : i32
    %c0_i32_0 = arith.constant 0 : i32
    %c0_i32_1 = arith.constant 0 : i32
    return %c0_i32, %c0_i32_0 : i32, i32
  }
  func.func @transform_2(%arg0: i32) -> (i32, i32) {
    %c0_i32 = arith.constant 0 : i32
    %c0_i32_0 = arith.constant 0 : i32
    %c0_i32_1 = arith.constant 0 : i32
    return %c0_i32, %c0_i32_0 : i32, i32
  }
  func.func @transform_3(%arg0: i32) -> (i32, i32) {
    %c0_i32 = arith.constant 0 : i32
    %c0_i32_0 = arith.constant 0 : i32
    return %arg0, %c0_i32 : i32, i32
  }
  func.func @transform_4(%arg0: i32) -> (i32, i32) {
    %c0_i32 = arith.constant 0 : i32
    %c0_i32_0 = arith.constant 0 : i32
    return %arg0, %c0_i32 : i32, i32
  }
  func.func @transform_5(%arg0: i32) -> (i32, i32) {
    %c0_i32 = arith.constant 0 : i32
    %c0_i32_0 = arith.constant 0 : i32
    return %arg0, %c0_i32 : i32, i32
  }
}

</mosaic_0001>

<llo_original>
// kernel: tpu_custom_call.1
$region0: #{tpu_custom_call.1}
  #allocation0 [shape = 'u32[]', space=smem, size = 0x4, offset = 0x4, fixed_abs, tag = 'smem constant byte address 0x4 - core index']
  #allocation1 [shape = 'u32[144,128]{1,0:T(1,128)}', space=vmem, size = 0x12000, scoped, tag = 'internal scratch']
  %s0 = inlined_call_operand.hbm [shape: f32[16,32], index: 0, kind: input, shape index: {}]
  %s1 = inlined_call_operand.hbm [shape: bf16[96,32], index: 1, kind: input, shape index: {}]
  %s2 = inlined_call_operand.hbm [shape: f32[1,96], index: 2, kind: input, shape index: {}]
  %s3 = inlined_call_operand.hbm [shape: f32[16,32], index: 3, kind: output, shape index: {0}]
  %s4 = inlined_call_operand.hbm [shape: f32[16,32], index: 4, kind: output, shape index: {1}]
  %s5 = inlined_call_operand.hbm [shape: f32[16,32], index: 5, kind: output, shape index: {2}]
  %6 = xla_tuple %s3, %s4, %s5
  %s7 = sld [smem:[#allocation0]]
  $region50: #{tpu_custom_call.1} parent=0
    _
  %s9 = ssub.s32 1, %s7
  %s10 = scalar_select 0, %s9, %s7
  $region1: #{tpu_custom_call.1} parent=0
    #allocation2 [shape = 'u8[8192]{0}', space=vmem, size = 0x2000, scoped, tag = 'input window, operand 0, single buffered']
    #allocation3 [shape = 's32[1]{0}', space=sflag, size = 0x4, scoped, tag = 'scoped memory for tpu_custom_call.1']
    #allocation4 [shape = 's32[1]{0}', space=sflag, size = 0x4, scoped, tag = 'scoped memory for tpu_custom_call.1']
    #allocation5 [shape = 'u8[24576]{0}', space=vmem, size = 0x6000, scoped, tag = 'input window, operand 1, single buffered']
    #allocation6 [shape = 's32[1]{0}', space=sflag, size = 0x4, scoped, tag = 'scoped memory for tpu_custom_call.1']
    #allocation7 [shape = 'u8[512]{0}', space=vmem, size = 0x400, scoped, tag = 'input window, operand 2, single buffered']
    #allocation8 [shape = 'u8[8192]{0}', space=vmem, size = 0x2000, scoped, tag = 'output window, operand 0, single buffered']
    #allocation9 [shape = 'u8[8192]{0}', space=vmem, size = 0x2000, scoped, tag = 'output window, operand 1, single buffered']
    #allocation10 [shape = 's32[1]{0}', space=sflag, size = 0x4, scoped, tag = 'scoped memory for tpu_custom_call.1']
    #allocation11 [shape = 'u8[8192]{0}', space=vmem, size = 0x2000, scoped, tag = 'output window, operand 2, single buffered']
    %11 = vsyncpa [#allocation3], 0
    %12 = vsyncpa [#allocation6], 0
    %13 = vsyncpa [#allocation4], 0
    %14 = vsyncpa [#allocation10], 0
    // Predicated region
    $region2: #{tpu_custom_call.1} parent=1 // pred_check
      _
    $region3: #{tpu_custom_call.1} parent=1 // pred_check_branch
      %16 = sbr.rel (0) target = $region5
    $region4: #{tpu_custom_call.1} parent=1 // pred_region
      %s18 = ssub.s32 256, 256
      %19 = vsyncadd [#allocation3], %s18
      %s20 = sshll.u32 [#allocation2], 4
      %s21 = int_to_ptr.vmem [resolvable:$true] %s20
      %26 = dma.hbm_to_vmem [thread:$0]  %s0, 256, %s21, [#allocation3], 128, 128, 8
    $region5: #{tpu_custom_call.1} parent=1 // pred_fallthru
      _
    // Predicated region
    $region6: #{tpu_custom_call.1} parent=1 // pred_check
      _
    $region7: #{tpu_custom_call.1} parent=1 // pred_check_branch
      %28 = sbr.rel (0) target = $region9
    $region8: #{tpu_custom_call.1} parent=1 // pred_region
      %s30 = ssub.s32 768, 768
      %31 = vsyncadd [#allocation6], %s30
      %s32 = sshll.u32 [#allocation5], 4
      %s33 = int_to_ptr.vmem [resolvable:$true] %s32
      %38 = dma.hbm_to_vmem [thread:$0]  %s1, 768, %s33, [#allocation6], 64, 64, 4
    $region9: #{tpu_custom_call.1} parent=1 // pred_fallthru
      _
    // Predicated region
    $region10: #{tpu_custom_call.1} parent=1 // pred_check
      _
    $region11: #{tpu_custom_call.1} parent=1 // pred_check_branch
      %40 = sbr.rel (0) target = $region13
    $region12: #{tpu_custom_call.1} parent=1 // pred_region
      %s42 = ssub.s32 16, 16
      %43 = vsyncadd [#allocation6], %s42
      %s45 = sshll.u32 [#allocation7], 4
      %s46 = int_to_ptr.vmem [resolvable:$true] %s45
      %48 = dma.hbm_to_vmem [thread:$0]  %s2, 16, %s46, [#allocation6]
    $region13: #{tpu_custom_call.1} parent=1 // pred_fallthru
      _
    // Predicated region
    $region14: #{tpu_custom_call.1} parent=1 // pred_check
      _
    $region15: #{tpu_custom_call.1} parent=1 // pred_check_branch
      %50 = sbr.rel (0) target = $region17
    $region16: #{tpu_custom_call.1} parent=1 // pred_region
      %51 = dma.done [#allocation3], 256
    $region17: #{tpu_custom_call.1} parent=1 // pred_fallthru
      _
    // Predicated region
    $region18: #{tpu_custom_call.1} parent=1 // pred_check
      _
    $region19: #{tpu_custom_call.1} parent=1 // pred_check_branch
      %53 = sbr.rel (0) target = $region21
    $region20: #{tpu_custom_call.1} parent=1 // pred_region
      %54 = dma.done [#allocation6], 768
    $region21: #{tpu_custom_call.1} parent=1 // pred_fallthru
      _
    // Predicated region
    $region22: #{tpu_custom_call.1} parent=1 // pred_check
      _
    $region23: #{tpu_custom_call.1} parent=1 // pred_check_branch
      %56 = sbr.rel (0) target = $region25
    $region24: #{tpu_custom_call.1} parent=1 // pred_region
      %57 = dma.done [#allocation6], 16
    $region25: #{tpu_custom_call.1} parent=1 // pred_fallthru
      _
    %v59 = vld [vmem:[#allocation2] sm:$0xff]
    %v60 = vld [vmem:[#allocation2 + $0x8] sm:$0xff]
    %v61 = vpack.c.bf16 %v60, %v59
    %v62 = vld [vmem:[#allocation5] sm:$0xf]
    %v63 = vld [vmem:[#allocation5 + $0x4] sm:$0xf]
    %v64 = vld [vmem:[#allocation5 + $0x8] sm:$0xf]
    %v65 = vld [vmem:[#allocation5 + $0xc] sm:$0xf]
    %v66 = vld [vmem:[#allocation5 + $0x10] sm:$0xf]
    %v67 = vld [vmem:[#allocation5 + $0x14] sm:$0xf]
    %v68 = vld [vmem:[#allocation5 + $0x18] sm:$0xf]
    %v69 = vld [vmem:[#allocation5 + $0x1c] sm:$0xf]
    %v70 = vld [vmem:[#allocation5 + $0x20] sm:$0xf]
    %v71 = vld [vmem:[#allocation5 + $0x24] sm:$0xf]
    %v72 = vld [vmem:[#allocation5 + $0x28] sm:$0xf]
    %v73 = vld [vmem:[#allocation5 + $0x2c] sm:$0xf]
    %v74 = vld [vmem:[#allocation7] sm:$0x1]
    %v76 = vlaneseq
    %v77 = vshrl.u32 %v76, 7
    %v78 = vsub.s32 0, %v77
    %v79 = vrot.slane %v74, %v78
    %v93 = vunpack.c.l.b16 %v62
    %v94 = vunpack.c.l.b16 %v63
    %v95 = vunpack.c.l.b16 %v64
    %v96 = vunpack.c.l.b16 %v65
    %v97 = vunpack.c.l.b16 %v66
    %v98 = vunpack.c.l.b16 %v67
    %v99 = vunpack.c.l.b16 %v68
    %v100 = vunpack.c.l.b16 %v69
    %v101 = vunpack.c.l.b16 %v70
    %v102 = vunpack.c.l.b16 %v71
    %v103 = vunpack.c.l.b16 %v72
    %v104 = vunpack.c.l.b16 %v73
    %v105 = vpack.c.b16 %v94, %v93
    %v106 = vpack.c.b16 %v96, %v95
    %v107 = vpack.c.b16 %v98, %v97
    %v108 = vpack.c.b16 %v100, %v99
    %v109 = vpack.c.b16 %v102, %v101
    %v110 = vpack.c.b16 %v104, %v103
    %vm111 = vcmask 261120
    %v113 = vsel %vm111, %v61, 0
    %v116 = vsel %vm111, %v105, 0
    %v119 = vsel %vm111, %v106, 0
    %v122 = vsel %vm111, %v107, 0
    %v125 = vsel %vm111, %v108, 0
    %v128 = vsel %vm111, %v109, 0
    %v131 = vsel %vm111, %v110, 0
    %133 = vmatprep.subr.bf16.mxu0 0
    %134 = vmatpush1.bf16.xpose.msra.mxu0 %v116
    %135 = vmatprep.subr.bf16.mxu0 0
    %136 = vmatpush1.bf16.xpose.msra.mxu0 %v119
    %137 = vmatprep.subr.bf16.mxu0 0
    %138 = vmatpush1.bf16.xpose.msra.mxu0 %v122
    %139 = vmatprep.subr.bf16.mxu0 0
    %140 = vmatpush1.bf16.xpose.msra.mxu0 %v125
    %141 = vmatprep.subr.bf16.mxu0 0
    %142 = vmatpush1.bf16.xpose.msra.mxu0 %v128
    %143 = vmatprep.subr.bf16.mxu0 0
    %144 = vmatpush1.bf16.xpose.msra.mxu0 %v131
    %145 = vmatprep.subr.bf16.mxu0 0
    %146 = vmatpush1.bf16.xpose.msra.mxu0 0
    %147 = vmatprep.subr.bf16.mxu0 0
    %148 = vmatpush1.bf16.xpose.msra.mxu0 0
    %149 = vmatprep.subr.bf16.mxu0 0
    %150 = vmatpush1.bf16.xpose.msra.mxu0 0
    %151 = vmatprep.subr.bf16.mxu0 0
    %152 = vmatpush1.bf16.xpose.msra.mxu0 0
    %153 = vmatprep.subr.bf16.mxu0 0
    %154 = vmatpush1.bf16.xpose.msra.mxu0 0
    %155 = vmatprep.subr.bf16.mxu0 0
    %156 = vmatpush1.bf16.xpose.msra.mxu0 0
    %157 = vmatprep.subr.bf16.mxu0 0
    %158 = vmatpush1.bf16.xpose.msra.mxu0 0
    %159 = vmatprep.subr.bf16.mxu0 0
    %160 = vmatpush1.bf16.xpose.msra.mxu0 0
    %161 = vmatprep.subr.bf16.mxu0 0
    %162 = vmatpush1.bf16.xpose.msra.mxu0 0
    %163 = vmatprep.subr.bf16.mxu0 0
    %164 = vmatpush1.bf16.xpose.msra.mxu0 0
    %165 = vmatprep.mubr.bf16.mxu0 0
    %166 = vmatmul.mubr.bf16.gmra.mrb[0].mxu0 %v113
    %v167 = vpop.f32.mrb[0].mxu0
    %v168 = vadd.f32 %v79, %v167
    %v169 = vpop.f32.mrb[0].mxu0
    %v170 = vpop.f32.mrb[0].mxu0
    %v171 = vadd.f32 %v79, %v170
    %v172 = vpop.f32.mrb[0].mxu0
    %173 = vdwg.mxu0
    %174 = vst.msk [vmem:[#allocation8] sm:$0xff] %vm111, %v168
    %175 = vst.msk [vmem:[#allocation8 + $0x8] sm:$0xff] %vm111, %v171
    %178 = vrot.lane.b32.xlu0 %v168, 96
    %v179 = vpop.permute.xlu0 %178
    %180 = vrot.lane.b32.xlu0 %v171, 96
    %v181 = vpop.permute.xlu0 %180
    %184 = vst.msk [vmem:[#allocation9] sm:$0xff] %vm111, %v179
    %185 = vst.msk [vmem:[#allocation9 + $0x8] sm:$0xff] %vm111, %v181
    %186 = vrot.lane.b32.xlu0 %v168, 64
    %v187 = vpop.permute.xlu0 %186
    %188 = vrot.lane.b32.xlu0 %v171, 64
    %v189 = vpop.permute.xlu0 %188
    %192 = vst.msk [vmem:[#allocation11] sm:$0xff] %vm111, %v187
    %193 = vst.msk [vmem:[#allocation11 + $0x8] sm:$0xff] %vm111, %v189
    // Predicated region
    $region26: #{tpu_custom_call.1} parent=1 // pred_check
      _
    $region27: #{tpu_custom_call.1} parent=1 // pred_check_branch
      %195 = sbr.rel (0) target = $region29
    $region28: #{tpu_custom_call.1} parent=1 // pred_region
      %s197 = ssub.s32 256, 256
      %198 = vsyncadd [#allocation4], %s197
      %s199 = sshll.u32 [#allocation8], 4
      %s200 = int_to_ptr.vmem [resolvable:$true] %s199
      %205 = dma.vmem_to_hbm [thread:$0]  %s200, 256, %s3, [#allocation4], 128, 128, 8
    $region29: #{tpu_custom_call.1} parent=1 // pred_fallthru
      _
    // Predicated region
    $region30: #{tpu_custom_call.1} parent=1 // pred_check
      _
    $region31: #{tpu_custom_call.1} parent=1 // pred_check_branch
      %207 = sbr.rel (0) target = $region33
    $region32: #{tpu_custom_call.1} parent=1 // pred_region
      %s209 = ssub.s32 256, 256
      %210 = vsyncadd [#allocation10], %s209
      %s211 = sshll.u32 [#allocation9], 4
      %s212 = int_to_ptr.vmem [resolvable:$true] %s211
      %217 = dma.vmem_to_hbm [thread:$0]  %s212, 256, %s4, [#allocation10], 128, 128, 8
    $region33: #{tpu_custom_call.1} parent=1 // pred_fallthru
      _
    // Predicated region
    $region34: #{tpu_custom_call.1} parent=1 // pred_check
      _
    $region35: #{tpu_custom_call.1} parent=1 // pred_check_branch
      %219 = sbr.rel (0) target = $region37
    $region36: #{tpu_custom_call.1} parent=1 // pred_region
      %s221 = ssub.s32 256, 256
      %222 = vsyncadd [#allocation10], %s221
      %s223 = sshll.u32 [#allocation11], 4
      %s224 = int_to_ptr.vmem [resolvable:$true] %s223
      %229 = dma.vmem_to_hbm [thread:$0]  %s224, 256, %s5, [#allocation10], 128, 128, 8
    $region37: #{tpu_custom_call.1} parent=1 // pred_fallthru
      _
    // Predicated region
    $region38: #{tpu_custom_call.1} parent=1 // pred_check
      _
    $region39: #{tpu_custom_call.1} parent=1 // pred_check_branch
      %231 = sbr.rel (0) target = $region41
    $region40: #{tpu_custom_call.1} parent=1 // pred_region
      %232 = dma.done [#allocation4], 256
    $region41: #{tpu_custom_call.1} parent=1 // pred_fallthru
      _
    // Predicated region
    $region42: #{tpu_custom_call.1} parent=1 // pred_check
      _
    $region43: #{tpu_custom_call.1} parent=1 // pred_check_branch
      %234 = sbr.rel (0) target = $region45
    $region44: #{tpu_custom_call.1} parent=1 // pred_region
      %235 = dma.done [#allocation10], 256
    $region45: #{tpu_custom_call.1} parent=1 // pred_fallthru
      _
    // Predicated region
    $region46: #{tpu_custom_call.1} parent=1 // pred_check
      _
    $region47: #{tpu_custom_call.1} parent=1 // pred_check_branch
      %237 = sbr.rel (0) target = $region49
    $region48: #{tpu_custom_call.1} parent=1 // pred_region
      %238 = dma.done [#allocation10], 256
    $region49: #{tpu_custom_call.1} parent=1 // pred_fallthru
      _
    %239 = vsyncpa [#allocation3], 1
    %240 = vsyncpa [#allocation6], 1
    %241 = vsyncpa [#allocation4], 1
    %242 = vsyncpa [#allocation10], 1

</llo_original>
